<compile_context>
chip_gen: v7x
topology: tpu7x:2x2x1
jax: 0.10.0
libtpu: 0.0.40
codegen_flags: <defaults>
</compile_context>

<pallas_src>
import functools

import jax
import jax.numpy as jnp
from jax.experimental import pallas as pl
from jax.experimental.pallas import tpu as pltpu


def _round_up(x: int, m: int) -> int:
    return ((x + m - 1) // m) * m


# ----------------------------------------------------------------------------
# Kernels
# ----------------------------------------------------------------------------
def _nlu_single_block_kernel(x_ref, w_ref, b_ref, o_ref, *,
                             pooling_style: str, inv_s: float):
    # Whole problem in one VMEM block (tiny inputs): no grid bookkeeping.
    x = x_ref[...].astype(jnp.float32)
    if pooling_style == "max":
        pooled = jnp.max(x, axis=1)
    else:
        pooled = jnp.sum(x, axis=1) * inv_s
    logits = jnp.dot(pooled, w_ref[...].astype(jnp.float32),
                     preferred_element_type=jnp.float32)
    o_ref[...] = (logits + b_ref[...]).astype(o_ref.dtype)


def _nlu_pool_classify_kernel(x_ref, w_ref, b_ref, o_ref, acc_ref, *,
                              pooling_style: str, seq_len: int, ts: int,
                              chunk: int, needs_mask: bool, inv_s: float):
    # x_ref: (TB, TS, H)  w_ref: (H, Cp)  b_ref: (1, Cp)
    # o_ref: (TB, Cp)     acc_ref: VMEM (TB, H) f32
    j = pl.program_id(1)
    ns = pl.num_programs(1)
    n_chunks = ts // chunk
    is_max = pooling_style == "max"
    fill = float("-inf") if is_max else 0.0
    h = x_ref.shape[-1]

    def reduce_chunk(k, acc):
        start = pl.multiple_of(k * chunk, 8)
        slab = x_ref[:, pl.ds(start, chunk), :].astype(jnp.float32)
        if needs_mask:
            # Mask rows past the true sequence length (ragged last S tile);
            # Pallas edge blocks have unspecified contents beyond the array.
            row = jax.lax.broadcasted_iota(jnp.int32, (chunk, h), 0)
            valid = (row + (j * ts + start)) < seq_len
            slab = jnp.where(valid[None, :, :], slab, fill)
        if is_max:
            return jnp.maximum(acc, jnp.max(slab, axis=1))
        return acc + jnp.sum(slab, axis=1)

    init = jnp.full(acc_ref.shape, fill, jnp.float32)
    part = jax.lax.fori_loop(0, n_chunks, reduce_chunk, init, unroll=True)

    @pl.when(j == 0)
    def _():
        acc_ref[...] = part

    @pl.when(j > 0)
    def _():
        if is_max:
            acc_ref[...] = jnp.maximum(acc_ref[...], part)
        else:
            acc_ref[...] = acc_ref[...] + part

    @pl.when(j == ns - 1)
    def _():
        pooled = acc_ref[...]
        if not is_max:
            pooled = pooled * inv_s                      # divide by TRUE S
        logits = jnp.dot(pooled, w_ref[...].astype(jnp.float32),
                         preferred_element_type=jnp.float32)
        o_ref[...] = (logits + b_ref[...]).astype(o_ref.dtype)


# ----------------------------------------------------------------------------
# Wrapper
# ----------------------------------------------------------------------------
def nlu_forward(x, w, b, *, pooling_style: str = "max"):
    """x: (B, S, H), w: (H, C), b: (C,) -> logits (B, C) float32."""
    if pooling_style not in ("max", "avg"):
        raise ValueError(f"unsupported pooling_style: {pooling_style!r}")

    B, S, H = x.shape
    C = w.shape[1]
    itemsize = x.dtype.itemsize
    inv_s = 1.0 / S
    b2 = b.reshape(1, C)
    x_bytes = B * S * H * itemsize

    # ---- tiny-input fast path: one block, no grid / scratch ----------------
    if x_bytes <= (256 << 10):
        kernel = functools.partial(_nlu_single_block_kernel,
                                   pooling_style=pooling_style, inv_s=inv_s)
        return pl.pallas_call(
            kernel,
            out_shape=jax.ShapeDtypeStruct((B, C), jnp.float32),
            in_specs=[pl.BlockSpec(memory_space=pltpu.MemorySpace.VMEM)] * 3,
            out_specs=pl.BlockSpec(memory_space=pltpu.MemorySpace.VMEM),
            cost_estimate=pl.CostEstimate(
                flops=B * S * H + 2 * B * H * C,
                transcendentals=0,
                bytes_accessed=x_bytes + H * C * 4 + C * 4 + B * C * 4),
        )(x, w, b2)

    # ---- generation-aware VMEM budget (v5e/v6e: 128 MiB, v7x: 64 MiB) ------
    try:
        vmem_phys = int(pltpu.get_tpu_info().vmem_capacity_bytes)
    except Exception:
        vmem_phys = 64 << 20                       # conservative (v7x) default
    vmem_limit = min(64 << 20, (vmem_phys * 3) // 4)
    x_buf_budget = max(2 << 20, min(16 << 20, vmem_limit // 4))

    gran = 8 if itemsize >= 4 else (16 if itemsize == 2 else 32)

    # Batch tile: multiple of 8, and >= 2 tiles whenever B allows so the
    # "parallel" grid axis shards across both TensorCores on v7x (a second
    # grid step is negligible on single-TC v5e/v6e).
    TB = B if B <= 8 else min(256, _round_up(pl.cdiv(B, 2), 8))
    while TB > 8 and TB * H * itemsize * gran > x_buf_budget:
        TB = _round_up(TB // 2, 8)                 # huge-H safety valve

    # Sequence tile: as many rows as the per-buffer budget allows, chunked
    # into <= 8 sublane-aligned slabs for the in-kernel reduce.
    row_bytes = TB * H * itemsize
    ts_budget = max(gran, x_buf_budget // row_bytes)
    ts0 = min(ts_budget, _round_up(S, gran))
    chunk = max(gran, _round_up(pl.cdiv(ts0, 8), gran))
    TS = chunk * min(pl.cdiv(ts0, chunk), pl.cdiv(S, chunk))
    n_s_tiles = pl.cdiv(S, TS)
    needs_mask = (n_s_tiles * TS) != S

    # Pad only the tiny classifier weight/bias: lane-dense (unmasked) output
    # store; padded columns are exact zeros and get sliced off.
    Cp = _round_up(C, 128)
    w_p = jnp.pad(w, ((0, 0), (0, Cp - C))) if Cp != C else w
    b_p = jnp.pad(b2, ((0, 0), (0, Cp - C))) if Cp != C else b2

    kernel = functools.partial(
        _nlu_pool_classify_kernel, pooling_style=pooling_style, seq_len=S,
        ts=TS, chunk=chunk, needs_mask=needs_mask, inv_s=inv_s)

    out = pl.pallas_call(
        kernel,
        out_shape=jax.ShapeDtypeStruct((B, Cp), jnp.float32),
        grid_spec=pltpu.PrefetchScalarGridSpec(
            num_scalar_prefetch=0,
            grid=(pl.cdiv(B, TB), n_s_tiles),
            in_specs=[
                pl.BlockSpec((TB, TS, H), lambda i, j: (i, j, 0)),
                pl.BlockSpec((H, Cp), lambda i, j: (0, 0)),     # resident
                pl.BlockSpec((1, Cp), lambda i, j: (0, 0)),     # resident
            ],
            out_specs=pl.BlockSpec((TB, Cp), lambda i, j: (i, 0)),
            scratch_shapes=[pltpu.VMEM((TB, H), jnp.float32)],
        ),
        compiler_params=pltpu.CompilerParams(
            dimension_semantics=("parallel", "arbitrary"),
            vmem_limit_bytes=vmem_limit,
        ),
        cost_estimate=pl.CostEstimate(
            flops=B * S * H + 2 * B * H * Cp,
            transcendentals=0,
            bytes_accessed=x_bytes + H * Cp * 4 + Cp * 4 + B * Cp * 4),
    )(x, w_p, b_p)

    return out[:, :C] if Cp != C else out


# TODO(synk): BertModel encoder (use_bert=True) and the cross_entropy training
# branch (target is not None) are not translated; this is the inference path.


if __name__ == "__main__":
    key = jax.random.PRNGKey(0)

    def make(B, S, H, C, k):
        kx, kw, kb = jax.random.split(k, 3)
        x = jax.random.normal(kx, (B, S, H), dtype=jnp.float32)
        bound = 1.0 / (H ** 0.5)             # deterministic nn.Linear-style init
        w = jax.random.uniform(kw, (H, C), minval=-bound, maxval=bound,
                               dtype=jnp.float32)
        b = jax.random.uniform(kb, (C,), minval=-bound, maxval=bound,
                               dtype=jnp.float32)
        return x, w, b

    ok = True
    # (1) config-implied small shapes (fast path): batch=2, seq=8, hidden=32,
    #     class_num=8.  (2) a slightly larger case that exercises the tiled
    #     grid path (ragged S, non-128 C, two parallel batch tiles).
    cases = [(2, 8, 32, 8), (32, 300, 128, 12)]
    for idx, (B, S, H, C) in enumerate(cases):
        x, w, b = make(B, S, H, C, jax.random.fold_in(key, idx))
        for style in ("max", "avg"):
            out = jax.block_until_ready(
                nlu_forward(x, w, b, pooling_style=style))
            pooled = jnp.max(x, axis=1) if style == "max" else jnp.mean(x, axis=1)
            ref = pooled @ w + b
            ok &= out.shape == (B, C)
            ok &= bool(jnp.allclose(out, ref, atol=1e-4, rtol=1e-4))

    assert ok
    print("KERNEL_OK")
</pallas_src>

<mosaic_0001>
module attributes {stable_mosaic.version = 11 : i64} {
  func.func @_nlu_single_block_kernel(%arg0: memref<2x8x32xf32, #tpu.memory_space<vmem>>, %arg1: memref<32x8xf32, #tpu.memory_space<vmem>>, %arg2: memref<1x8xf32, #tpu.memory_space<vmem>>, %arg3: memref<2x8xf32, #tpu.memory_space<vmem>>) attributes {dimension_semantics = [], scalar_prefetch = 0 : i64, scratch_operands = 0 : i64, tpu.core_type = #tpu.core_type<tc>} {
    %c0 = arith.constant 0 : index
    %c0_0 = arith.constant 0 : index
    %c0_1 = arith.constant 0 : index
    %0 = vector.load %arg0[%c0, %c0_0, %c0_1] : memref<2x8x32xf32, #tpu.memory_space<vmem>>, vector<2x8x32xf32>
    %cst = arith.constant dense<0xFF800000> : vector<2x32xf32>
    %1 = vector.multi_reduction <maximumf>, %0, %cst [1] : vector<2x8x32xf32> to vector<2x32xf32>
    %c0_2 = arith.constant 0 : index
    %c0_3 = arith.constant 0 : index
    %2 = vector.load %arg1[%c0_2, %c0_3] : memref<32x8xf32, #tpu.memory_space<vmem>>, vector<32x8xf32>
    %cst_4 = arith.constant dense<0.000000e+00> : vector<2x8xf32>
    %3 = tpu.matmul %1, %2, %cst_4 {dimension_numbers = #tpu.dot_dimension_numbers<[1], [0], [0], [1], [0, 0, 1, 1], [], []>} : vector<2x32xf32>, vector<32x8xf32>, vector<2x8xf32> -> vector<2x8xf32>
    %c0_5 = arith.constant 0 : index
    %c0_6 = arith.constant 0 : index
    %4 = vector.load %arg2[%c0_5, %c0_6] : memref<1x8xf32, #tpu.memory_space<vmem>>, vector<1x8xf32>
    %5 = vector.broadcast %4 : vector<1x8xf32> to vector<2x8xf32>
    %6 = arith.addf %3, %5 : vector<2x8xf32>
    %c0_7 = arith.constant 0 : index
    %c0_8 = arith.constant 0 : index
    %7 = vector.load %arg3[%c0_7, %c0_8] : memref<2x8xf32, #tpu.memory_space<vmem>>, vector<2x8xf32>
    tpu.vector_store %arg3[%c0_7, %c0_8], %6 {strides = array<i32>} : memref<2x8xf32, #tpu.memory_space<vmem>>, vector<2x8xf32>,
    return
  }
}

</mosaic_0001>

<llo_original>
// kernel: tpu_custom_call.1
$region0: #{tpu_custom_call.1}
  #allocation0 [shape = 'u32[]', space=smem, size = 0x4, offset = 0x4, fixed_abs, tag = 'smem constant byte address 0x4 - core index']
  #allocation1 [shape = 'u32[144,128]{1,0:T(1,128)}', space=vmem, size = 0x12000, scoped, tag = 'internal scratch']
  %s0 = inlined_call_operand.vmem [shape: f32[2,8,32], index: 0, kind: input, shape index: {}]
  %s1 = inlined_call_operand.vmem [shape: f32[32,8], index: 1, kind: input, shape index: {}]
  %s2 = inlined_call_operand.vmem [shape: f32[1,8], index: 2, kind: input, shape index: {}]
  %s3 = inlined_call_operand.hbm [shape: f32[2,8], index: 3, kind: output, shape index: {}]
  %s4 = sld [smem:[#allocation0]]
  $region22: #{tpu_custom_call.1} parent=0
    _
  %s6 = ssub.s32 1, %s4
  %s7 = scalar_select 0, %s6, %s4
  $region1: #{tpu_custom_call.1} parent=0
    #allocation2 [shape = 'u8[1024]{0}', space=vmem, size = 0x400, scoped, tag = 'output window, operand 0, single buffered']
    #allocation3 [shape = 's32[1]{0}', space=sflag, size = 0x4, scoped, tag = 'scoped memory for tpu_custom_call.1']
    %8 = vsyncpa [#allocation3], 0
    // Predicated region
    $region2: #{tpu_custom_call.1} parent=1 // pred_check
      _
    $region3: #{tpu_custom_call.1} parent=1 // pred_check_branch
      %10 = sbr.rel (0) target = $region5
    $region4: #{tpu_custom_call.1} parent=1 // pred_region
      _
    $region5: #{tpu_custom_call.1} parent=1 // pred_fallthru
      _
    // Predicated region
    $region6: #{tpu_custom_call.1} parent=1 // pred_check
      _
    $region7: #{tpu_custom_call.1} parent=1 // pred_check_branch
      %12 = sbr.rel (0) target = $region9
    $region8: #{tpu_custom_call.1} parent=1 // pred_region
      _
    $region9: #{tpu_custom_call.1} parent=1 // pred_fallthru
      _
    // Predicated region
    $region10: #{tpu_custom_call.1} parent=1 // pred_check
      _
    $region11: #{tpu_custom_call.1} parent=1 // pred_check_branch
      %14 = sbr.rel (0) target = $region13
    $region12: #{tpu_custom_call.1} parent=1 // pred_region
      _
    $region13: #{tpu_custom_call.1} parent=1 // pred_fallthru
      _
    %v15 = vld [vmem:[%s0] sm:$0xff]
    %v16 = vld [vmem:[%s0 + $0x8] sm:$0xff]
    %vm17 = vcmask 261120
    %v18 = vsel %vm17, %v15, -inf
    %v19 = vrot.slane %v18, 4
    %v20 = vmax.f32 %v18, %v19
    %v21 = vrot.slane %v20, 2
    %v22 = vmax.f32 %v20, %v21
    %v23 = vrot.slane %v22, 1
    %v24 = vmax.f32 %v22, %v23
    %v25 = vsel %vm17, %v16, -inf
    %v26 = vrot.slane %v25, 4
    %v27 = vmax.f32 %v25, %v26
    %v28 = vrot.slane %v27, 2
    %v29 = vmax.f32 %v27, %v28
    %v30 = vrot.slane %v29, 1
    %v31 = vmax.f32 %v29, %v30
    %v32 = vld [vmem:[%s1] sm:$0xff]
    %v33 = vld [vmem:[%s1 + $0x8] sm:$0xff]
    %v34 = vld [vmem:[%s1 + $0x10] sm:$0xff]
    %v35 = vld [vmem:[%s1 + $0x18] sm:$0xff]
    %v36 = vld [vmem:[%s2] sm:$0x1]
    %v38 = vlaneseq
    %v39 = vshrl.u32 %v38, 7
    %v40 = vsub.s32 0, %v39
    %v41 = vrot.slane %v36, %v40
    %vm45 = vcmask 1041409
    %v46 = vsel %vm45, %v31, %v24
    %v47 = vsel %vm17, %v46, 0
    %49 = vmatprep.subr.mxu0 0.0
    %50 = vmatpush1.msra.mxu0 %v32
    %51 = vmatprep.subr.mxu0 0.0
    %52 = vmatpush1.msra.mxu0 %v33
    %53 = vmatprep.subr.mxu0 0.0
    %54 = vmatpush1.msra.mxu0 %v34
    %55 = vmatprep.subr.mxu0 0.0
    %56 = vmatpush1.msra.mxu0 %v35
    %57 = vmatprep.subr.mxu0 0.0
    %58 = vmatpush1.msra.mxu0 0.0
    %59 = vmatprep.subr.mxu0 0.0
    %60 = vmatpush1.msra.mxu0 0.0
    %61 = vmatprep.subr.mxu0 0.0
    %62 = vmatpush1.msra.mxu0 0.0
    %63 = vmatprep.subr.mxu0 0.0
    %64 = vmatpush1.msra.mxu0 0.0
    %65 = vmatprep.subr.mxu0 0.0
    %66 = vmatpush1.msra.mxu0 0.0
    %67 = vmatprep.subr.mxu0 0.0
    %68 = vmatpush1.msra.mxu0 0.0
    %69 = vmatprep.subr.mxu0 0.0
    %70 = vmatpush1.msra.mxu0 0.0
    %71 = vmatprep.subr.mxu0 0.0
    %72 = vmatpush1.msra.mxu0 0.0
    %73 = vmatprep.subr.mxu0 0.0
    %74 = vmatpush1.msra.mxu0 0.0
    %75 = vmatprep.subr.mxu0 0.0
    %76 = vmatpush1.msra.mxu0 0.0
    %77 = vmatprep.subr.mxu0 0.0
    %78 = vmatpush1.msra.mxu0 0.0
    %79 = vmatprep.subr.mxu0 0.0
    %80 = vmatpush1.msra.mxu0 0.0
    %81 = vmatprep.subr.mxu0 0.0
    %82 = vmatpush1.msra.mxu0 0.0
    %83 = vmatprep.subr.mxu0 0.0
    %84 = vmatpush1.msra.mxu0 0.0
    %85 = vmatprep.subr.mxu0 0.0
    %86 = vmatpush1.msra.mxu0 0.0
    %87 = vmatprep.subr.mxu0 0.0
    %88 = vmatpush1.msra.mxu0 0.0
    %89 = vmatprep.subr.mxu0 0.0
    %90 = vmatpush1.msra.mxu0 0.0
    %91 = vmatprep.subr.mxu0 0.0
    %92 = vmatpush1.msra.mxu0 0.0
    %93 = vmatprep.subr.mxu0 0.0
    %94 = vmatpush1.msra.mxu0 0.0
    %95 = vmatprep.subr.mxu0 0.0
    %96 = vmatpush1.msra.mxu0 0.0
    %97 = vmatprep.subr.mxu0 0.0
    %98 = vmatpush1.msra.mxu0 0.0
    %99 = vmatprep.subr.mxu0 0.0
    %100 = vmatpush1.msra.mxu0 0.0
    %101 = vmatprep.subr.mxu0 0.0
    %102 = vmatpush1.msra.mxu0 0.0
    %103 = vmatprep.subr.mxu0 0.0
    %104 = vmatpush1.msra.mxu0 0.0
    %105 = vmatprep.subr.mxu0 0.0
    %106 = vmatpush1.msra.mxu0 0.0
    %107 = vmatprep.subr.mxu0 0.0
    %108 = vmatpush1.msra.mxu0 0.0
    %109 = vmatprep.subr.mxu0 0.0
    %110 = vmatpush1.msra.mxu0 0.0
    %111 = vmatprep.subr.mxu0 0.0
    %112 = vmatpush1.msra.mxu0 0.0
    %113 = vmatprep.mubr.f32.mxu0 0.0
    %114 = vmatmul.mubr.f32.gmra.mrb[0].mxu0 %v47
    %v115 = vpop.f32.mrb[0].mxu0
    %v116 = vadd.f32 %v41, %v115
    %v117 = vpop.f32.mrb[0].mxu0
    %118 = vdwg.mxu0
    %vm119 = vcmask 58368
    %120 = vst.msk [vmem:[#allocation2] sm:$0x3] %vm119, %v116
    // Predicated region
    $region14: #{tpu_custom_call.1} parent=1 // pred_check
      _
    $region15: #{tpu_custom_call.1} parent=1 // pred_check_branch
      %122 = sbr.rel (0) target = $region17
    $region16: #{tpu_custom_call.1} parent=1 // pred_region
      %s124 = ssub.s32 32, 32
      %125 = vsyncadd [#allocation3], %s124
      %s127 = sshll.u32 [#allocation2], 4
      %s128 = int_to_ptr.vmem [resolvable:$true] %s127
      %130 = dma.vmem_to_hbm [thread:$0]  %s128, 32, %s3, [#allocation3]
    $region17: #{tpu_custom_call.1} parent=1 // pred_fallthru
      _
    // Predicated region
    $region18: #{tpu_custom_call.1} parent=1 // pred_check
      _
    $region19: #{tpu_custom_call.1} parent=1 // pred_check_branch
      %132 = sbr.rel (0) target = $region21
    $region20: #{tpu_custom_call.1} parent=1 // pred_region
      %133 = dma.done [#allocation3], 32
    $region21: #{tpu_custom_call.1} parent=1 // pred_fallthru
      _
    %134 = vsyncpa [#allocation3], 1

</llo_original>
